<compile_context>
chip_gen: v5e
topology: v5e:2x2
jax: 0.10.0
libtpu: 0.0.40
codegen_flags: <defaults>
</compile_context>

<pallas_src>
import jax
import jax.numpy as jnp
from jax import lax
from jax.experimental import pallas as pl
from jax.experimental.pallas import tpu as pltpu


LANE_CHUNK = 256  # lanes per inner chunk: h1 f32 = 16 vregs, h2 f32 = 8 vregs per chunk


def mlp_kernel(x_ref, w1_ref, b1_ref, w2_ref, b2_ref, w3_ref, b3_ref, o_ref):
    tb = o_ref.shape[1]
    n_chunks = tb // LANE_CHUNK            # static at trace time

    # Hoist the resident weights/biases out of the chunk loop once
    # (JAX does not CSE broadcasts inside loops).
    w1 = w1_ref[...]                        # (64, 4)  bf16
    w2 = w2_ref[...]                        # (32, 64) bf16
    w3 = w3_ref[...].astype(jnp.float32)    # (32, 1)  f32
    b1 = b1_ref[...]                        # (64, 1)  f32
    b2 = b2_ref[...]                        # (32, 1)  f32
    b3 = b3_ref[...]                        # (1, 1)   f32

    def chunk(c, carry):
        off = pl.multiple_of(c * LANE_CHUNK, LANE_CHUNK)
        xc = x_ref[:, pl.ds(off, LANE_CHUNK)]                         # (4, LC) bf16

        # Layer 1 (MXU, K=4): (64,4)@(4,LC) -> f32; bias + ReLU on the VPU.
        h1 = jnp.dot(w1, xc, preferred_element_type=jnp.float32)
        h1 = jnp.maximum(h1 + b1, 0.0)
        # TODO(synk): on v6e/v7x a bf16 layer-1 epilogue (preferred_element_type=bf16,
        # bf16 bias/ReLU) would cut VALU work ~2x; kept in f32 for v5e portability.

        # Layer 2 (MXU, K=64): (32,64)@(64,LC) -> f32.
        h2 = jnp.dot(w2, h1.astype(jnp.bfloat16),
                     preferred_element_type=jnp.float32)
        h2 = jnp.maximum(h2 + b2, 0.0)

        # Layer 3 on the VPU/XLU: out[0,:] = sum_k w3[k,0]*h2[k,:] + b3
        # (avoids wasting a full M=1 MXU push/pop).
        out = jnp.sum(h2 * w3, axis=0, keepdims=True) + b3            # (1, LC) f32
        o_ref[:, pl.ds(off, LANE_CHUNK)] = out.astype(o_ref.dtype)
        return carry

    lax.fori_loop(0, n_chunks, chunk, 0, unroll=True)


def _round_up(n, m):
    return (n + m - 1) // m * m


def _cdiv(a, b):
    return -(-a // b)


def _plan_grid(batch, block_b):
    """Pick (grid, TB, B_pad).

    TB is a multiple of LANE_CHUNK; the grid is >= 2 (and even) whenever the
    batch allows, so both TensorCores get work on v7x and the input/output DMAs
    are pipelined; padding waste is bounded by ~grid*LANE_CHUNK rows.
    """
    block_b = _round_up(max(block_b, LANE_CHUNK), LANE_CHUNK)
    b128 = _round_up(max(batch, 1), 128)
    grid = _cdiv(b128, block_b)
    if grid == 1 and b128 >= 2 * LANE_CHUNK:
        grid = 2                      # split a lone block across the two TCs
    if grid > 1 and grid % 2 == 1:
        grid += 1                     # even grid -> balanced megacore split
    tb = _round_up(_cdiv(b128, grid), LANE_CHUNK)
    return grid, tb, grid * tb


def mlp_forward_fm(xt, w1, b1, w2, b2, w3, b3, *, block_b=4096):
    """Feature-major fast path.

    xt: (4, B), any float dtype (cast to bf16 here).  Returns (1, B) float32.
    Per-grid-step VMEM is ~24 B/lane (double-buffered bf16 x tile + f32 out
    tile) plus ~9 KB of resident weights; activations stay in vregs thanks to
    the in-kernel chunk loop, so block_b can be raised freely on any chip.
    """
    n_feat, B = xt.shape
    assert n_feat == 4
    grid_n, tb, b_pad = _plan_grid(B, block_b)

    xp = jnp.pad(xt.astype(jnp.bfloat16), ((0, 0), (0, b_pad - B)))   # (4, B_pad)
    w1b = w1.astype(jnp.bfloat16)                                     # (64, 4)
    w2b = w2.astype(jnp.bfloat16)                                     # (32, 64)
    w3c = w3.T.astype(jnp.bfloat16)                                   # (32, 1)
    b1c = b1.reshape(64, 1).astype(jnp.float32)
    b2c = b2.reshape(32, 1).astype(jnp.float32)
    b3c = b3.reshape(1, 1).astype(jnp.float32)

    out = pl.pallas_call(
        mlp_kernel,
        out_shape=jax.ShapeDtypeStruct((1, b_pad), jnp.float32),
        grid=(grid_n,),
        in_specs=[
            pl.BlockSpec((4, tb), lambda i: (0, i)),      # x tile, batch on lanes
            pl.BlockSpec((64, 4), lambda i: (0, 0)),      # weights/biases stay resident
            pl.BlockSpec((64, 1), lambda i: (0, 0)),
            pl.BlockSpec((32, 64), lambda i: (0, 0)),
            pl.BlockSpec((32, 1), lambda i: (0, 0)),
            pl.BlockSpec((32, 1), lambda i: (0, 0)),
            pl.BlockSpec((1, 1), lambda i: (0, 0)),
        ],
        out_specs=pl.BlockSpec((1, tb), lambda i: (0, i)),
        compiler_params=pltpu.CompilerParams(dimension_semantics=("parallel",)),
    )(xp, w1b, b1c, w2b, b2c, w3c, b3c)

    return out[:, :B]


def mlp_forward(x, w1, b1, w2, b2, w3, b3, *, block_b=4096):
    """PyTorch-layout adapter: x (B, 4) float32 -> (B, 1) float32.

    The (B,4)->(4,B) cast+transpose+pad and the (1,B)->(B,1) reshape are the
    only wrapper-side relayouts; call this under jax.jit (as in __main__) so
    they fuse into single passes, or call mlp_forward_fm directly when the
    data is already feature-major.
    """
    B = x.shape[0]
    out = mlp_forward_fm(x.T, w1, b1, w2, b2, w3, b3, block_b=block_b)
    return out.reshape(B, 1)


def init_params(key):
    # PyTorch nn.Linear layout: weight (out, in), bias (out,), U(-1/sqrt(fan_in), +).
    ks = jax.random.split(key, 6)

    def unif(k, shape, fan_in):
        bound = 1.0 / jnp.sqrt(fan_in)
        return jax.random.uniform(k, shape, jnp.float32, -bound, bound)

    w1 = unif(ks[0], (64, 4), 4.0)
    b1 = unif(ks[1], (64,), 4.0)
    w2 = unif(ks[2], (32, 64), 64.0)
    b2 = unif(ks[3], (32,), 64.0)
    w3 = unif(ks[4], (1, 32), 32.0)
    b3 = unif(ks[5], (1,), 32.0)
    return w1, b1, w2, b2, w3, b3


if __name__ == "__main__":
    key = jax.random.PRNGKey(0)
    k_x, k_p = jax.random.split(key)

    batch = 300
    x = jax.random.normal(k_x, (batch, 4), jnp.float32)
    params = init_params(k_p)

    # Pure-JAX reference of the same math, mirroring the kernel's bf16 casts
    # (inputs/weights and the layer-1 activations are bf16, accumulation in f32).
    w1, b1, w2, b2, w3, b3 = params
    q = lambda a: a.astype(jnp.bfloat16).astype(jnp.float32)
    h1 = jnp.maximum(q(x) @ q(w1).T + b1, 0.0)
    h2 = jnp.maximum(q(h1) @ q(w2).T + b2, 0.0)
    ref = h2 @ q(w3).T + b3

    # Config A: block_b=256 -> grid of 2 ("parallel" -> both TCs on v7x) with a
    # padded batch tail; exercises the multi-step pipeline.
    fwd_small = jax.jit(lambda xx, *p: mlp_forward(xx, *p, block_b=256))
    out = jax.block_until_ready(fwd_small(x, *params))
    assert out.shape == (batch, 1)
    assert jnp.allclose(out, ref, atol=1e-2, rtol=1e-2)

    # Config B: default block_b -> single grid step with a multi-chunk unrolled
    # inner loop; exercises the in-vreg chunking path.
    fwd_big = jax.jit(lambda xx, *p: mlp_forward(xx, *p))
    out2 = jax.block_until_ready(fwd_big(x, *params))
    assert out2.shape == (batch, 1)
    assert jnp.allclose(out2, ref, atol=1e-2, rtol=1e-2)

    print("KERNEL_OK")
</pallas_src>

<mosaic_0001>
module attributes {stable_mosaic.version = 11 : i64} {
  func.func @mlp_kernel(%arg0: i32, %arg1: memref<4x256xbf16, #tpu.memory_space<vmem>>, %arg2: memref<64x4xbf16, #tpu.memory_space<vmem>>, %arg3: memref<64x1xf32, #tpu.memory_space<vmem>>, %arg4: memref<32x64xbf16, #tpu.memory_space<vmem>>, %arg5: memref<32x1xf32, #tpu.memory_space<vmem>>, %arg6: memref<32x1xbf16, #tpu.memory_space<vmem>>, %arg7: memref<1x1xf32, #tpu.memory_space<vmem>>, %arg8: memref<1x256xf32, #tpu.memory_space<vmem>>) attributes {dimension_semantics = [#tpu.dimension_semantics<parallel>], iteration_bounds = array<i64: 2>, scalar_prefetch = 0 : i64, scratch_operands = 0 : i64, tpu.core_type = #tpu.core_type<tc>, window_params = [{transform_indices = @transform_0, window_bounds = array<i64: 4, 256>}, {pipeline_mode = #tpu.pipeline_mode<synchronous>, transform_indices = @transform_1, window_bounds = array<i64: 64, 4>}, {pipeline_mode = #tpu.pipeline_mode<synchronous>, transform_indices = @transform_2, window_bounds = array<i64: 64, 1>}, {pipeline_mode = #tpu.pipeline_mode<synchronous>, transform_indices = @transform_3, window_bounds = array<i64: 32, 64>}, {pipeline_mode = #tpu.pipeline_mode<synchronous>, transform_indices = @transform_4, window_bounds = array<i64: 32, 1>}, {pipeline_mode = #tpu.pipeline_mode<synchronous>, transform_indices = @transform_5, window_bounds = array<i64: 32, 1>}, {pipeline_mode = #tpu.pipeline_mode<synchronous>, transform_indices = @transform_6, window_bounds = array<i64: 1, 1>}, {transform_indices = @transform_7, window_bounds = array<i64: 1, 256>}]} {
    %c0 = arith.constant 0 : index
    %c0_0 = arith.constant 0 : index
    %0 = vector.load %arg2[%c0, %c0_0] : memref<64x4xbf16, #tpu.memory_space<vmem>>, vector<64x4xbf16>
    %c0_1 = arith.constant 0 : index
    %c0_2 = arith.constant 0 : index
    %1 = vector.load %arg4[%c0_1, %c0_2] : memref<32x64xbf16, #tpu.memory_space<vmem>>, vector<32x64xbf16>
    %c0_3 = arith.constant 0 : index
    %c0_4 = arith.constant 0 : index
    %2 = vector.load %arg6[%c0_3, %c0_4] : memref<32x1xbf16, #tpu.memory_space<vmem>>, vector<32x1xbf16>
    %3 = arith.extf %2 : vector<32x1xbf16> to vector<32x1xf32>
    %c0_5 = arith.constant 0 : index
    %c0_6 = arith.constant 0 : index
    %4 = vector.load %arg3[%c0_5, %c0_6] : memref<64x1xf32, #tpu.memory_space<vmem>>, vector<64x1xf32>
    %c0_7 = arith.constant 0 : index
    %c0_8 = arith.constant 0 : index
    %5 = vector.load %arg5[%c0_7, %c0_8] : memref<32x1xf32, #tpu.memory_space<vmem>>, vector<32x1xf32>
    %c0_9 = arith.constant 0 : index
    %c0_10 = arith.constant 0 : index
    %6 = vector.load %arg7[%c0_9, %c0_10] : memref<1x1xf32, #tpu.memory_space<vmem>>, vector<1x1xf32>
    %c0_i32 = arith.constant 0 : i32
    %c256_i32 = arith.constant 256 : i32
    %7 = arith.muli %c0_i32, %c256_i32 : i32
    %8 = tpu.assume_multiple %7, 256 : i32
    %c0_11 = arith.constant 0 : index
    %9 = arith.index_cast %8 : i32 to index
    %10 = vector.load %arg1[%c0_11, %9] : memref<4x256xbf16, #tpu.memory_space<vmem>>, vector<4x256xbf16>
    %cst = arith.constant dense<0.000000e+00> : vector<64x256xf32>
    %11 = tpu.matmul %0, %10, %cst {dimension_numbers = #tpu.dot_dimension_numbers<[1], [0], [0], [1], [0, 0, 1, 1], [], []>} : vector<64x4xbf16>, vector<4x256xbf16>, vector<64x256xf32> -> vector<64x256xf32>
    %12 = vector.broadcast %4 : vector<64x1xf32> to vector<64x256xf32>
    %13 = arith.addf %11, %12 : vector<64x256xf32>
    %cst_12 = arith.constant 0.000000e+00 : f32
    %14 = vector.broadcast %cst_12 : f32 to vector<64x256xf32>
    %15 = arith.maximumf %13, %14 : vector<64x256xf32>
    %16 = arith.truncf %15 : vector<64x256xf32> to vector<64x256xbf16>
    %cst_13 = arith.constant dense<0.000000e+00> : vector<32x256xf32>
    %17 = tpu.matmul %1, %16, %cst_13 {dimension_numbers = #tpu.dot_dimension_numbers<[1], [0], [0], [1], [0, 0, 1, 1], [], []>} : vector<32x64xbf16>, vector<64x256xbf16>, vector<32x256xf32> -> vector<32x256xf32>
    %18 = vector.broadcast %5 : vector<32x1xf32> to vector<32x256xf32>
    %19 = arith.addf %17, %18 : vector<32x256xf32>
    %cst_14 = arith.constant 0.000000e+00 : f32
    %20 = vector.broadcast %cst_14 : f32 to vector<32x256xf32>
    %21 = arith.maximumf %19, %20 : vector<32x256xf32>
    %22 = vector.broadcast %3 : vector<32x1xf32> to vector<32x256xf32>
    %23 = arith.mulf %21, %22 : vector<32x256xf32>
    %cst_15 = arith.constant dense<0.000000e+00> : vector<256xf32>
    %24 = vector.multi_reduction <add>, %23, %cst_15 [0] : vector<32x256xf32> to vector<256xf32>
    %25 = vector.shape_cast %24 : vector<256xf32> to vector<1x256xf32>
    %26 = vector.broadcast %6 : vector<1x1xf32> to vector<1x256xf32>
    %27 = arith.addf %25, %26 : vector<1x256xf32>
    %c0_16 = arith.constant 0 : index
    %28 = arith.index_cast %8 : i32 to index
    %29 = vector.load %arg8[%c0_16, %28] : memref<1x256xf32, #tpu.memory_space<vmem>>, vector<1x256xf32>
    tpu.vector_store %arg8[%c0_16, %28], %27 {strides = array<i32>} : memref<1x256xf32, #tpu.memory_space<vmem>>, vector<1x256xf32>,
    %c1_i32 = arith.constant 1 : i32
    return
  }
  func.func @transform_0(%arg0: i32) -> (i32, i32) {
    %c0_i32 = arith.constant 0 : i32
    %c0_i32_0 = arith.constant 0 : i32
    return %c0_i32, %arg0 : i32, i32
  }
  func.func @transform_1(%arg0: i32) -> (i32, i32) {
    %c0_i32 = arith.constant 0 : i32
    %c0_i32_0 = arith.constant 0 : i32
    %c0_i32_1 = arith.constant 0 : i32
    return %c0_i32, %c0_i32_0 : i32, i32
  }
  func.func @transform_2(%arg0: i32) -> (i32, i32) {
    %c0_i32 = arith.constant 0 : i32
    %c0_i32_0 = arith.constant 0 : i32
    %c0_i32_1 = arith.constant 0 : i32
    return %c0_i32, %c0_i32_0 : i32, i32
  }
  func.func @transform_3(%arg0: i32) -> (i32, i32) {
    %c0_i32 = arith.constant 0 : i32
    %c0_i32_0 = arith.constant 0 : i32
    %c0_i32_1 = arith.constant 0 : i32
    return %c0_i32, %c0_i32_0 : i32, i32
  }
  func.func @transform_4(%arg0: i32) -> (i32, i32) {
    %c0_i32 = arith.constant 0 : i32
    %c0_i32_0 = arith.constant 0 : i32
    %c0_i32_1 = arith.constant 0 : i32
    return %c0_i32, %c0_i32_0 : i32, i32
  }
  func.func @transform_5(%arg0: i32) -> (i32, i32) {
    %c0_i32 = arith.constant 0 : i32
    %c0_i32_0 = arith.constant 0 : i32
    %c0_i32_1 = arith.constant 0 : i32
    return %c0_i32, %c0_i32_0 : i32, i32
  }
  func.func @transform_6(%arg0: i32) -> (i32, i32) {
    %c0_i32 = arith.constant 0 : i32
    %c0_i32_0 = arith.constant 0 : i32
    %c0_i32_1 = arith.constant 0 : i32
    return %c0_i32, %c0_i32_0 : i32, i32
  }
  func.func @transform_7(%arg0: i32) -> (i32, i32) {
    %c0_i32 = arith.constant 0 : i32
    %c0_i32_0 = arith.constant 0 : i32
    return %c0_i32, %arg0 : i32, i32
  }
}

</mosaic_0001>

<llo_original>
// kernel: _lambda_.1
$region0: #{_lambda_.1}
  #allocation0 [shape = 'u32[]', space=smem, size = 0x4, offset = 0x4, fixed_abs, tag = 'smem constant byte address 0x4 - core index']
  #allocation1 [shape = 'u32[72,128]{1,0:T(1,128)}', space=vmem, size = 0x9000, scoped, tag = 'internal scratch']
  #allocation2 [shape = 'f32[1,1]{1,0:T(1,128)S(1)}', space=vmem, size = 0x200, scoped, tag = 'scoped memory for _lambda_.1']
  %s0 = inlined_call_operand.vmem [shape: bf16[4,512], index: 0, kind: input, shape index: {}]
  %s1 = inlined_call_operand.vmem [shape: bf16[64,4], index: 1, kind: input, shape index: {}]
  %s2 = inlined_call_operand.vmem [shape: f32[64,1], index: 2, kind: input, shape index: {}]
  %s3 = inlined_call_operand.vmem [shape: bf16[32,64], index: 3, kind: input, shape index: {}]
  %s4 = inlined_call_operand.vmem [shape: f32[32,1], index: 4, kind: input, shape index: {}]
  %s5 = inlined_call_operand.vmem [shape: bf16[32,1], index: 5, kind: input, shape index: {}]
  %s6 = inlined_call_operand.<no memory space> [shape: f32[1,1], index: 6, kind: input, shape index: {}]
  %s7 = inlined_call_operand.vmem [shape: f32[1,512], index: 7, kind: output, shape index: {}]
  %s8 = sld [smem:[#allocation0]]
  $region61: #{_lambda_.1} parent=0
    _
  %s10 = ssub.s32 1, %s8
  %s11 = scalar_select 0, %s10, %s8
  %v12 = vstv %s6
  %13 = vst [vmem:[#allocation2] sm:$0x1] %v12
  loop: start=0, step=1, limit=4
  $region2: #{_lambda_.1} parent=0 // loop_pre_header
    _
  $region3: #{_lambda_.1} parent=0 // loop_header
    %s15 = sphi 0, %s19
    %p16 = scmp.ge.s32.totalorder %s15, 4
    %s25 = sphi 0, %s27
    %s28 = sphi 0, %s25
    %s29 = sphi 0, %s28
    %s45 = sphi 0, %s29
    %s49 = sphi 0, %s49
    %s51 = sphi 0, %s49
    %s52 = sphi 0, %s51
    %s66 = sphi 0, %s52
    %s70 = sphi 0, %s70
    %s72 = sphi 0, %s70
    %s73 = sphi 0, %s72
    %s87 = sphi 0, %s73
    %s91 = sphi 0, %s91
    %s93 = sphi 0, %s91
    %s94 = sphi 0, %s93
    %s108 = sphi 0, %s94
    %s112 = sphi 0, %s112
    %s114 = sphi 0, %s112
    %s115 = sphi 0, %s114
    %s129 = sphi 0, %s115
    %s133 = sphi 0, %s133
    %s135 = sphi 0, %s133
    %s136 = sphi 0, %s135
    %s150 = sphi 0, %s136
    %s154 = sphi 0, %s154
    %s156 = sphi 0, %s154
    %s157 = sphi 0, %s156
    %s171 = sphi 0, %s157
    %s177 = sphi 0, %s179
    %s180 = sphi 0, %s177
    %s181 = sphi 0, %s180
    %s197 = sphi 0, %s181
  $region4: #{_lambda_.1} parent=0 // loop_header_branch
    %18 = sbr.rel (%p16) target = $region8
  $region5: #{_lambda_.1} parent=0 // loop_body
    %s20 = ssub.s32 %s15, 1
    %s21 = ssub.s32 %s15, 2
    %s22 = sadd.s32 %s15, 1
    %s23 = ssub.s32 %s15, %s22
    %p24 = scmp.eq.s32.totalorder %s23, 0
    %s26 = sadd.s32 %s25, 1
    %s27 = scalar_select %p24, %s25, %s26
    %p30 = pneg %p24
    %p31 = scmp.eq.s32.totalorder %s15, 1
    %p32 = por %p30, %p31
    %p33 = scmp.ne.s32.totalorder %s25, %s28
    %p34 = scmp.eq.s32.totalorder %s15, 0
    %p35 = por %p33, %p34
    %p36 = scmp.ne.s32.totalorder %s25, %s28
    %p37 = scmp.eq.s32.totalorder %s20, 1
    %p38 = por %p36, %p37
    %p39 = scmp.ne.s32.totalorder %s28, %s29
    %p40 = scmp.eq.s32.totalorder %s20, 0
    %p41 = por %p39, %p40
    %p42 = scmp.ne.s32.totalorder %s28, %s29
    %p43 = scmp.eq.s32.totalorder %s21, 1
    %p44 = por %p42, %p43
    %p46 = scmp.ne.s32.totalorder %s29, %s45
    %p47 = scmp.eq.s32.totalorder %s21, 0
    %p48 = por %p46, %p47
    %s50 = sadd.s32 %s49, 1
    %p53 = scmp.eq.s32.totalorder %s15, 1
    %p54 = scmp.ne.s32.totalorder %s49, %s51
    %p55 = scmp.eq.s32.totalorder %s15, 0
    %p56 = por %p54, %p55
    %p57 = scmp.ne.s32.totalorder %s49, %s51
    %p58 = scmp.eq.s32.totalorder %s20, 1
    %p59 = por %p57, %p58
    %p60 = scmp.ne.s32.totalorder %s51, %s52
    %p61 = scmp.eq.s32.totalorder %s20, 0
    %p62 = por %p60, %p61
    %p63 = scmp.ne.s32.totalorder %s51, %s52
    %p64 = scmp.eq.s32.totalorder %s21, 1
    %p65 = por %p63, %p64
    %p67 = scmp.ne.s32.totalorder %s52, %s66
    %p68 = scmp.eq.s32.totalorder %s21, 0
    %p69 = por %p67, %p68
    %s71 = sadd.s32 %s70, 1
    %p74 = scmp.eq.s32.totalorder %s15, 1
    %p75 = scmp.ne.s32.totalorder %s70, %s72
    %p76 = scmp.eq.s32.totalorder %s15, 0
    %p77 = por %p75, %p76
    %p78 = scmp.ne.s32.totalorder %s70, %s72
    %p79 = scmp.eq.s32.totalorder %s20, 1
    %p80 = por %p78, %p79
    %p81 = scmp.ne.s32.totalorder %s72, %s73
    %p82 = scmp.eq.s32.totalorder %s20, 0
    %p83 = por %p81, %p82
    %p84 = scmp.ne.s32.totalorder %s72, %s73
    %p85 = scmp.eq.s32.totalorder %s21, 1
    %p86 = por %p84, %p85
    %p88 = scmp.ne.s32.totalorder %s73, %s87
    %p89 = scmp.eq.s32.totalorder %s21, 0
    %p90 = por %p88, %p89
    %s92 = sadd.s32 %s91, 1
    %p95 = scmp.eq.s32.totalorder %s15, 1
    %p96 = scmp.ne.s32.totalorder %s91, %s93
    %p97 = scmp.eq.s32.totalorder %s15, 0
    %p98 = por %p96, %p97
    %p99 = scmp.ne.s32.totalorder %s91, %s93
    %p100 = scmp.eq.s32.totalorder %s20, 1
    %p101 = por %p99, %p100
    %p102 = scmp.ne.s32.totalorder %s93, %s94
    %p103 = scmp.eq.s32.totalorder %s20, 0
    %p104 = por %p102, %p103
    %p105 = scmp.ne.s32.totalorder %s93, %s94
    %p106 = scmp.eq.s32.totalorder %s21, 1
    %p107 = por %p105, %p106
    %p109 = scmp.ne.s32.totalorder %s94, %s108
    %p110 = scmp.eq.s32.totalorder %s21, 0
    %p111 = por %p109, %p110
    %s113 = sadd.s32 %s112, 1
    %p116 = scmp.eq.s32.totalorder %s15, 1
    %p117 = scmp.ne.s32.totalorder %s112, %s114
    %p118 = scmp.eq.s32.totalorder %s15, 0
    %p119 = por %p117, %p118
    %p120 = scmp.ne.s32.totalorder %s112, %s114
    %p121 = scmp.eq.s32.totalorder %s20, 1
    %p122 = por %p120, %p121
    %p123 = scmp.ne.s32.totalorder %s114, %s115
    %p124 = scmp.eq.s32.totalorder %s20, 0
    %p125 = por %p123, %p124
    %p126 = scmp.ne.s32.totalorder %s114, %s115
    %p127 = scmp.eq.s32.totalorder %s21, 1
    %p128 = por %p126, %p127
    %p130 = scmp.ne.s32.totalorder %s115, %s129
    %p131 = scmp.eq.s32.totalorder %s21, 0
    %p132 = por %p130, %p131
    %s134 = sadd.s32 %s133, 1
    %p137 = scmp.eq.s32.totalorder %s15, 1
    %p138 = scmp.ne.s32.totalorder %s133, %s135
    %p139 = scmp.eq.s32.totalorder %s15, 0
    %p140 = por %p138, %p139
    %p141 = scmp.ne.s32.totalorder %s133, %s135
    %p142 = scmp.eq.s32.totalorder %s20, 1
    %p143 = por %p141, %p142
    %p144 = scmp.ne.s32.totalorder %s135, %s136
    %p145 = scmp.eq.s32.totalorder %s20, 0
    %p146 = por %p144, %p145
    %p147 = scmp.ne.s32.totalorder %s135, %s136
    %p148 = scmp.eq.s32.totalorder %s21, 1
    %p149 = por %p147, %p148
    %p151 = scmp.ne.s32.totalorder %s136, %s150
    %p152 = scmp.eq.s32.totalorder %s21, 0
    %p153 = por %p151, %p152
    %s155 = sadd.s32 %s154, 1
    %p158 = scmp.eq.s32.totalorder %s15, 1
    %p159 = scmp.ne.s32.totalorder %s154, %s156
    %p160 = scmp.eq.s32.totalorder %s15, 0
    %p161 = por %p159, %p160
    %p162 = scmp.ne.s32.totalorder %s154, %s156
    %p163 = scmp.eq.s32.totalorder %s20, 1
    %p164 = por %p162, %p163
    %p165 = scmp.ne.s32.totalorder %s156, %s157
    %p166 = scmp.eq.s32.totalorder %s20, 0
    %p167 = por %p165, %p166
    %p168 = scmp.ne.s32.totalorder %s156, %s157
    %p169 = scmp.eq.s32.totalorder %s21, 1
    %p170 = por %p168, %p169
    %p172 = scmp.ne.s32.totalorder %s157, %s171
    %p173 = scmp.eq.s32.totalorder %s21, 0
    %p174 = por %p172, %p173
    %s175 = ssub.s32 %s15, %s22
    %p176 = scmp.eq.s32.totalorder %s175, 0
    %s178 = sadd.s32 %s177, 1
    %s179 = scalar_select %p176, %s177, %s178
    %p182 = pneg %p176
    %p183 = scmp.eq.s32.totalorder %s15, 1
    %p184 = por %p182, %p183
    %p185 = scmp.ne.s32.totalorder %s177, %s180
    %p186 = scmp.eq.s32.totalorder %s15, 0
    %p187 = por %p185, %p186
    %p188 = scmp.ne.s32.totalorder %s177, %s180
    %p189 = scmp.eq.s32.totalorder %s20, 1
    %p190 = por %p188, %p189
    %p191 = scmp.ne.s32.totalorder %s180, %s181
    %p192 = scmp.eq.s32.totalorder %s20, 0
    %p193 = por %p191, %p192
    %p194 = scmp.ne.s32.totalorder %s180, %s181
    %p195 = scmp.eq.s32.totalorder %s21, 1
    %p196 = por %p194, %p195
    %p198 = scmp.ne.s32.totalorder %s181, %s197
    %p199 = scmp.eq.s32.totalorder %s21, 0
    %p200 = por %p198, %p199
    %p201 = scmp.le.s32.totalorder 1, %s15
    %p202 = scmp.lt.s32.totalorder %s15, 3
    %p203 = pnand %p201, %p202
    %p204 = pneg %p203
    // Predicated region
    $region9: #{_lambda_.1} parent=5 // pred_check
      _
    $region10: #{_lambda_.1} parent=5 // pred_check_branch
      %206 = sbr.rel (%p203) target = $region12
    $region11: #{_lambda_.1} parent=5 // pred_region
      %s207 = ssub.s32 %s15, 1
      // Predicated region
      $region13: #{_lambda_.1} parent=11 // pred_check
        %p208 = pneg %p62
      $region14: #{_lambda_.1} parent=11 // pred_check_branch
        %210 = sbr.rel (%p208) target = $region16
      $region15: #{_lambda_.1} parent=11 // pred_region
        _
      $region16: #{_lambda_.1} parent=11 // pred_fallthru
        _
      // Predicated region
      $region17: #{_lambda_.1} parent=11 // pred_check
        %p211 = pneg %p83
      $region18: #{_lambda_.1} parent=11 // pred_check_branch
        %213 = sbr.rel (%p211) target = $region20
      $region19: #{_lambda_.1} parent=11 // pred_region
        _
      $region20: #{_lambda_.1} parent=11 // pred_fallthru
        _
      // Predicated region
      $region21: #{_lambda_.1} parent=11 // pred_check
        %p214 = pneg %p104
      $region22: #{_lambda_.1} parent=11 // pred_check_branch
        %216 = sbr.rel (%p214) target = $region24
      $region23: #{_lambda_.1} parent=11 // pred_region
        _
      $region24: #{_lambda_.1} parent=11 // pred_fallthru
        _
      // Predicated region
      $region25: #{_lambda_.1} parent=11 // pred_check
        %p217 = pneg %p125
      $region26: #{_lambda_.1} parent=11 // pred_check_branch
        %219 = sbr.rel (%p217) target = $region28
      $region27: #{_lambda_.1} parent=11 // pred_region
        _
      $region28: #{_lambda_.1} parent=11 // pred_fallthru
        _
      // Predicated region
      $region29: #{_lambda_.1} parent=11 // pred_check
        %p220 = pneg %p146
      $region30: #{_lambda_.1} parent=11 // pred_check_branch
        %222 = sbr.rel (%p220) target = $region32
      $region31: #{_lambda_.1} parent=11 // pred_region
        _
      $region32: #{_lambda_.1} parent=11 // pred_fallthru
        _
      // Predicated region
      $region33: #{_lambda_.1} parent=11 // pred_check
        %p223 = pneg %p167
      $region34: #{_lambda_.1} parent=11 // pred_check_branch
        %225 = sbr.rel (%p223) target = $region36
      $region35: #{_lambda_.1} parent=11 // pred_region
        _
      $region36: #{_lambda_.1} parent=11 // pred_fallthru
        _
    $region12: #{_lambda_.1} parent=5 // pred_fallthru
      _
    %p226 = scmp.lt.s32.totalorder %s15, 2
    // Predicated region
    $region37: #{_lambda_.1} parent=5 // pred_check
      %p227 = pneg %p226
    $region38: #{_lambda_.1} parent=5 // pred_check_branch
      %229 = sbr.rel (%p227) target = $region40
    $region39: #{_lambda_.1} parent=5 // pred_region
      // Predicated region
      $region41: #{_lambda_.1} parent=39 // pred_check
        %p230 = pneg %p35
      $region42: #{_lambda_.1} parent=39 // pred_check_branch
        %232 = sbr.rel (%p230) target = $region44
      $region43: #{_lambda_.1} parent=39 // pred_region
        %s233 = smul.u32 2, %s15
        %p234 = scmp.lt.s32.totalorder %s233, 3
        %s235 = scalar_select %p234, %s233, 3
        %s236 = smul.addr %s235, 2
        %s237 = scalar_lea.vmem %s0, %s236
        %s238 = smul.u32 2, %s15
      $region44: #{_lambda_.1} parent=39 // pred_fallthru
        _
    $region40: #{_lambda_.1} parent=5 // pred_fallthru
      _
    %p239 = scmp.le.s32.totalorder 1, %s15
    %p240 = scmp.lt.s32.totalorder %s15, 3
    %p241 = pnand %p239, %p240
    %p242 = pneg %p241
    // Predicated region
    $region45: #{_lambda_.1} parent=5 // pred_check
      _
    $region46: #{_lambda_.1} parent=5 // pred_check_branch
      %244 = sbr.rel (%p241) target = $region48
    $region47: #{_lambda_.1} parent=5 // pred_region
      %s245 = ssub.s32 %s15, 1
      %s246 = smul.u32 2, %s20
      %p247 = scmp.lt.s32.totalorder %s246, 3
      %s248 = scalar_select %p247, %s246, 3
      %s249 = smul.addr %s248, 2
      %s250 = scalar_lea.vmem %s0, %s249
      %p251 = pneg %p41
      %p252 = pneg %p38
      %p253 = pneg %p62
      %p254 = pneg %p59
      %p255 = pneg %p83
      %p256 = pneg %p80
      %p257 = pneg %p104
      %p258 = pneg %p101
      %p259 = pneg %p125
      %p260 = pneg %p122
      %p261 = pneg %p146
      %p262 = pneg %p143
      %p263 = pneg %p167
      %p264 = pneg %p164
      %p265 = pneg %p193
      %p266 = pneg %p190
      %s267 = smul.u32 2, %s20
      %p268 = scmp.lt.s32.totalorder %s267, 3
      %s269 = scalar_select %p268, %s267, 3
      %s270 = scalar_lea.vmem %s7, %s269
      %s271 = smul.u32 2, %s20
      %p272 = scmp.lt.s32.totalorder %s271, 3
      %s273 = scalar_select %p272, %s271, 3
      %s274 = smul.addr %s273, 2
      %s275 = scalar_lea.vmem %s0, %s274
      %s276 = smul.u32 2, %s20
      %s277 = smul.u32 2, %s20
      %p278 = scmp.lt.s32.totalorder %s277, 3
      %s279 = scalar_select %p278, %s277, 3
      %s280 = scalar_lea.vmem %s7, %s279
      %s281 = smul.u32 2, %s20
      %v283 = vld [vmem:[%s1] sm:$0xf]
      %v284 = vld [vmem:[%s1 + $0x4] sm:$0xf]
      %v285 = vld [vmem:[%s1 + $0x8] sm:$0xf]
      %v286 = vld [vmem:[%s1 + $0xc] sm:$0xf]
      %v287 = vld [vmem:[%s1 + $0x10] sm:$0xf]
      %v288 = vld [vmem:[%s1 + $0x14] sm:$0xf]
      %v289 = vld [vmem:[%s1 + $0x18] sm:$0xf]
      %v290 = vld [vmem:[%s1 + $0x1c] sm:$0xf]
      %v291 = vld [vmem:[%s3] sm:$0xf]
      %v292 = vld [vmem:[%s3 + $0x4] sm:$0xf]
      %v293 = vld [vmem:[%s3 + $0x8] sm:$0xf]
      %v294 = vld [vmem:[%s3 + $0xc] sm:$0xf]
      %v295 = vld [vmem:[%s5] sm:$0xf]
      %v296 = vld [vmem:[%s5 + $0x4] sm:$0xf]
      %v297 = vld [vmem:[%s5 + $0x8] sm:$0xf]
      %v298 = vld [vmem:[%s5 + $0xc] sm:$0xf]
      %v299 = vunpack.c.l.bf16 %v295
      %v300 = vunpack.c.l.bf16 %v296
      %v301 = vunpack.c.l.bf16 %v297
      %v302 = vunpack.c.l.bf16 %v298
      %v303 = vld [vmem:[%s2] sm:$0xff]
      %v304 = vld [vmem:[%s2 + $0x8] sm:$0xff]
      %v305 = vld [vmem:[%s2 + $0x10] sm:$0xff]
      %v306 = vld [vmem:[%s2 + $0x18] sm:$0xff]
      %v307 = vld [vmem:[%s2 + $0x20] sm:$0xff]
      %v308 = vld [vmem:[%s2 + $0x28] sm:$0xff]
      %v309 = vld [vmem:[%s2 + $0x30] sm:$0xff]
      %v310 = vld [vmem:[%s2 + $0x38] sm:$0xff]
      %v311 = vld [vmem:[%s4] sm:$0xff]
      %v312 = vld [vmem:[%s4 + $0x8] sm:$0xff]
      %v313 = vld [vmem:[%s4 + $0x10] sm:$0xff]
      %v314 = vld [vmem:[%s4 + $0x18] sm:$0xff]
      %v315 = vld [vmem:[#allocation2] sm:$0x1]
      %v316 = vld [vmem:[%s275] sm:$0xf]
      %318 = vset.pattern.permute.xlu0 0
      %319 = vperm.xlu0 %318, %v303
      %v320 = vpop.permute.xlu0 %319
      %323 = vset.pattern.permute.xlu0 0
      %324 = vperm.xlu0 %323, %v304
      %v325 = vpop.permute.xlu0 %324
      %328 = vset.pattern.permute.xlu0 0
      %329 = vperm.xlu0 %328, %v305
      %v330 = vpop.permute.xlu0 %329
      %333 = vset.pattern.permute.xlu0 0
      %334 = vperm.xlu0 %333, %v306
      %v335 = vpop.permute.xlu0 %334
      %338 = vset.pattern.permute.xlu0 0
      %339 = vperm.xlu0 %338, %v307
      %v340 = vpop.permute.xlu0 %339
      %343 = vset.pattern.permute.xlu0 0
      %344 = vperm.xlu0 %343, %v308
      %v345 = vpop.permute.xlu0 %344
      %348 = vset.pattern.permute.xlu0 0
      %349 = vperm.xlu0 %348, %v309
      %v350 = vpop.permute.xlu0 %349
      %353 = vset.pattern.permute.xlu0 0
      %354 = vperm.xlu0 %353, %v310
      %v355 = vpop.permute.xlu0 %354
      %v365 = vunpack.c.l.b16 %v283
      %v366 = vunpack.c.l.b16 %v284
      %v367 = vunpack.c.l.b16 %v285
      %v368 = vunpack.c.l.b16 %v286
      %v369 = vunpack.c.l.b16 %v287
      %v370 = vunpack.c.l.b16 %v288
      %v371 = vunpack.c.l.b16 %v289
      %v372 = vunpack.c.l.b16 %v290
      %v373 = vpack.c.b16 %v366, %v365
      %v374 = vpack.c.b16 %v368, %v367
      %v375 = vpack.c.b16 %v370, %v369
      %v376 = vpack.c.b16 %v372, %v371
      %378 = vst [vmem:[#allocation1] ss:$4 sm:$0xff] %v316
      %v379 = vld.sshfl [vmem:[#allocation1] sm:$0xff pattern:$0x73625140]
      %v380 = vld.sshfl [vmem:[#allocation1 + $0x8] sm:$0xff pattern:$0x73625140]
      %vm381 = vcmask 31744
      %v383 = vsel %vm381, %v373, 0
      %v386 = vsel %vm381, %v374, 0
      %v389 = vsel %vm381, %v375, 0
      %v392 = vsel %vm381, %v376, 0
      %vm394 = vcmask 1041408
      %v395 = vsel %vm394, %v379, 0
      %v397 = vsel %vm394, %v380, 0
      %399 = vmatpush.bf16.msra.mxu0 0
      %400 = vmatpush.bf16.msra.mxu0 0
      %401 = vmatpush.bf16.msra.mxu0 0
      %402 = vmatpush.bf16.msra.mxu0 0
      %403 = vmatpush.bf16.msra.mxu0 0
      %404 = vmatpush.bf16.msra.mxu0 0
      %405 = vmatpush.bf16.msra.mxu0 0
      %406 = vmatpush.bf16.msra.mxu0 %v395
      %407 = vmatmul.bf16.gmra.mxu0 %v383
      %v408 = vpop.f32.mrf.mxu0
      %v409 = vadd.f32 %v320, %v408
      %v410 = vpop.f32.mrf.mxu0
      %v411 = vadd.f32 %v325, %v410
      %412 = vmatmul.bf16.gmra.mxu0 %v386
      %v413 = vpop.f32.mrf.mxu0
      %v414 = vadd.f32 %v330, %v413
      %v415 = vpop.f32.mrf.mxu0
      %v416 = vadd.f32 %v335, %v415
      %417 = vmatmul.bf16.gmra.mxu0 %v389
      %v418 = vpop.f32.mrf.mxu0
      %v419 = vadd.f32 %v340, %v418
      %v420 = vpop.f32.mrf.mxu0
      %v421 = vadd.f32 %v345, %v420
      %422 = vmatmul.bf16.gmra.mxu0 %v392
      %v423 = vpop.f32.mrf.mxu0
      %v424 = vadd.f32 %v350, %v423
      %v425 = vpop.f32.mrf.mxu0
      %v426 = vadd.f32 %v355, %v425
      %427 = vdwg.mxu0
      %428 = vmatpush.bf16.msra.mxu0 0
      %429 = vmatpush.bf16.msra.mxu0 0
      %430 = vmatpush.bf16.msra.mxu0 0
      %431 = vmatpush.bf16.msra.mxu0 0
      %432 = vmatpush.bf16.msra.mxu0 0
      %433 = vmatpush.bf16.msra.mxu0 0
      %434 = vmatpush.bf16.msra.mxu0 0
      %435 = vmatpush.bf16.msra.mxu0 %v397
      %436 = vmatmul.bf16.gmra.mxu0 %v383
      %v437 = vpop.f32.mrf.mxu0
      %v438 = vadd.f32 %v320, %v437
      %v439 = vpop.f32.mrf.mxu0
      %v440 = vadd.f32 %v325, %v439
      %441 = vmatmul.bf16.gmra.mxu0 %v386
      %v442 = vpop.f32.mrf.mxu0
      %v443 = vadd.f32 %v330, %v442
      %v444 = vpop.f32.mrf.mxu0
      %v445 = vadd.f32 %v335, %v444
      %446 = vmatmul.bf16.gmra.mxu0 %v389
      %v447 = vpop.f32.mrf.mxu0
      %v448 = vadd.f32 %v340, %v447
      %v449 = vpop.f32.mrf.mxu0
      %v450 = vadd.f32 %v345, %v449
      %451 = vmatmul.bf16.gmra.mxu0 %v392
      %v452 = vpop.f32.mrf.mxu0
      %v453 = vadd.f32 %v350, %v452
      %v454 = vpop.f32.mrf.mxu0
      %v455 = vadd.f32 %v355, %v454
      %456 = vdwg.mxu0
      %v457 = vmax.f32 %v409, 0.0
      %v458 = vmax.f32 %v438, 0.0
      %v459 = vmax.f32 %v411, 0.0
      %v460 = vmax.f32 %v440, 0.0
      %v461 = vmax.f32 %v414, 0.0
      %v462 = vmax.f32 %v443, 0.0
      %v463 = vmax.f32 %v416, 0.0
      %v464 = vmax.f32 %v445, 0.0
      %v465 = vmax.f32 %v419, 0.0
      %v466 = vmax.f32 %v448, 0.0
      %v467 = vmax.f32 %v421, 0.0
      %v468 = vmax.f32 %v450, 0.0
      %v469 = vmax.f32 %v424, 0.0
      %v470 = vmax.f32 %v453, 0.0
      %v471 = vmax.f32 %v426, 0.0
      %v472 = vmax.f32 %v455, 0.0
      %v473 = vpack.c.bf16 %v459, %v457
      %v474 = vpack.c.bf16 %v460, %v458
      %v475 = vpack.c.bf16 %v463, %v461
      %v476 = vpack.c.bf16 %v464, %v462
      %v477 = vpack.c.bf16 %v467, %v465
      %v478 = vpack.c.bf16 %v468, %v466
      %v479 = vpack.c.bf16 %v471, %v469
      %v480 = vpack.c.bf16 %v472, %v470
      %482 = vset.pattern.permute.xlu0 0
      %483 = vperm.xlu0 %482, %v311
      %v484 = vpop.permute.xlu0 %483
      %487 = vset.pattern.permute.xlu0 0
      %488 = vperm.xlu0 %487, %v312
      %v489 = vpop.permute.xlu0 %488
      %492 = vset.pattern.permute.xlu0 0
      %493 = vperm.xlu0 %492, %v313
      %v494 = vpop.permute.xlu0 %493
      %497 = vset.pattern.permute.xlu0 0
      %498 = vperm.xlu0 %497, %v314
      %v499 = vpop.permute.xlu0 %498
      %v505 = vunpack.c.l.b16 %v291
      %v506 = vunpack.c.l.b16 %v292
      %v507 = vunpack.c.l.b16 %v293
      %v508 = vunpack.c.l.b16 %v294
      %v509 = vpack.c.b16 %v506, %v505
      %v510 = vpack.c.b16 %v508, %v507
      %vm511 = vcmask 523264
      %v513 = vsel %vm511, %v509, 0
      %v516 = vsel %vm511, %v510, 0
      %518 = vmatpush.bf16.msra.mxu0 0
      %519 = vmatpush.bf16.msra.mxu0 0
      %520 = vmatpush.bf16.msra.mxu0 0
      %521 = vmatpush.bf16.msra.mxu0 0
      %522 = vmatpush.bf16.msra.mxu0 %v479
      %523 = vmatpush.bf16.msra.mxu0 %v477
      %524 = vmatpush.bf16.msra.mxu0 %v475
      %525 = vmatpush.bf16.msra.mxu0 %v473
      %526 = vmatmul.bf16.gmra.mxu0 %v513
      %v527 = vpop.f32.mrf.mxu0
      %v528 = vadd.f32 %v484, %v527
      %v529 = vpop.f32.mrf.mxu0
      %v530 = vadd.f32 %v489, %v529
      %531 = vmatmul.bf16.gmra.mxu0 %v516
      %v532 = vpop.f32.mrf.mxu0
      %v533 = vadd.f32 %v494, %v532
      %v534 = vpop.f32.mrf.mxu0
      %v535 = vadd.f32 %v499, %v534
      %536 = vdwg.mxu0
      %537 = vmatpush.bf16.msra.mxu0 0
      %538 = vmatpush.bf16.msra.mxu0 0
      %539 = vmatpush.bf16.msra.mxu0 0
      %540 = vmatpush.bf16.msra.mxu0 0
      %541 = vmatpush.bf16.msra.mxu0 %v480
      %542 = vmatpush.bf16.msra.mxu0 %v478
      %543 = vmatpush.bf16.msra.mxu0 %v476
      %544 = vmatpush.bf16.msra.mxu0 %v474
      %545 = vmatmul.bf16.gmra.mxu0 %v513
      %v546 = vpop.f32.mrf.mxu0
      %v547 = vadd.f32 %v484, %v546
      %v548 = vpop.f32.mrf.mxu0
      %v549 = vadd.f32 %v489, %v548
      %550 = vmatmul.bf16.gmra.mxu0 %v516
      %v551 = vpop.f32.mrf.mxu0
      %v552 = vadd.f32 %v494, %v551
      %v553 = vpop.f32.mrf.mxu0
      %v554 = vadd.f32 %v499, %v553
      %555 = vdwg.mxu0
      %v556 = vmax.f32 %v528, 0.0
      %v557 = vmax.f32 %v547, 0.0
      %v558 = vmax.f32 %v530, 0.0
      %v559 = vmax.f32 %v549, 0.0
      %v560 = vmax.f32 %v533, 0.0
      %v561 = vmax.f32 %v552, 0.0
      %v562 = vmax.f32 %v535, 0.0
      %v563 = vmax.f32 %v554, 0.0
      %565 = vset.pattern.permute.xlu0 0
      %566 = vperm.xlu0 %565, %v299
      %v567 = vpop.permute.xlu0 %566
      %570 = vset.pattern.permute.xlu0 0
      %571 = vperm.xlu0 %570, %v300
      %v572 = vpop.permute.xlu0 %571
      %575 = vset.pattern.permute.xlu0 0
      %576 = vperm.xlu0 %575, %v301
      %v577 = vpop.permute.xlu0 %576
      %580 = vset.pattern.permute.xlu0 0
      %581 = vperm.xlu0 %580, %v302
      %v582 = vpop.permute.xlu0 %581
      %v584 = vmul.f32 %v556, %v567
      %v585 = vmul.f32 %v557, %v567
      %v586 = vmul.f32 %v558, %v572
      %v587 = vmul.f32 %v559, %v572
      %v588 = vmul.f32 %v560, %v577
      %v589 = vmul.f32 %v561, %v577
      %v590 = vmul.f32 %v562, %v582
      %v591 = vmul.f32 %v563, %v582
      %v592 = vadd.f32 %v584, %v586
      %v593 = vadd.f32 %v592, %v588
      %v594 = vadd.f32 %v593, %v590
      %v595 = vrot.slane %v594, 4
      %v596 = vadd.f32 %v594, %v595
      %v597 = vrot.slane %v596, 2
      %v598 = vadd.f32 %v596, %v597
      %v599 = vrot.slane %v598, 1
      %v600 = vadd.f32 %v598, %v599
      %v601 = vadd.f32 %v585, %v587
      %v602 = vadd.f32 %v601, %v589
      %v603 = vadd.f32 %v602, %v591
      %v604 = vrot.slane %v603, 4
      %v605 = vadd.f32 %v603, %v604
      %v606 = vrot.slane %v605, 2
      %v607 = vadd.f32 %v605, %v606
      %v608 = vrot.slane %v607, 1
      %v609 = vadd.f32 %v607, %v608
      %611 = vset.pattern.permute.xlu0 0
      %612 = vperm.xlu0 %611, %v315
      %v613 = vpop.permute.xlu0 %612
      %v615 = vperm.slane %v613, 0
      %v616 = vadd.f32 %v600, %v615
      %v617 = vadd.f32 %v609, %v615
      %v620 = vrot.slane %v617, 7
      %vm621 = vcmask 1040384
      %v622 = vsel %vm621, %v616, %v620
      %v624 = vlaneseq
      %vm625 = vcmp.ge.s32.totalorder %v624, 0
      %vm626 = vcmp.lt.s32.totalorder %v624, 256
      %vm627 = vmand %vm625, %vm626
      %628 = vst.msk [vmem:[%s280] sm:$0x3] %vm627, %v622
      %s629 = smul.u32 2, %s20
      %p630 = scmp.lt.s32.totalorder %s629, 3
      %s631 = scalar_select %p630, %s629, 3
      %s632 = scalar_lea.vmem %s7, %s631
      // Predicated region
      $region49: #{_lambda_.1} parent=47 // pred_check
        %p633 = pneg %p190
      $region50: #{_lambda_.1} parent=47 // pred_check_branch
        %635 = sbr.rel (%p633) target = $region52
      $region51: #{_lambda_.1} parent=47 // pred_region
        %s636 = smul.u32 2, %s20
      $region52: #{_lambda_.1} parent=47 // pred_fallthru
        _
    $region48: #{_lambda_.1} parent=5 // pred_fallthru
      _
    %p637 = scmp.le.s32.totalorder 2, %s15
    // Predicated region
    $region53: #{_lambda_.1} parent=5 // pred_check
      %p638 = pneg %p637
    $region54: #{_lambda_.1} parent=5 // pred_check_branch
      %640 = sbr.rel (%p638) target = $region56
    $region55: #{_lambda_.1} parent=5 // pred_region
      %s641 = ssub.s32 %s15, 2
      // Predicated region
      $region57: #{_lambda_.1} parent=55 // pred_check
        %p642 = pneg %p196
      $region58: #{_lambda_.1} parent=55 // pred_check_branch
        %644 = sbr.rel (%p642) target = $region60
      $region59: #{_lambda_.1} parent=55 // pred_region
        %s645 = smul.u32 2, %s21
        %p646 = scmp.lt.s32.totalorder %s645, 3
        %s647 = scalar_select %p646, %s645, 3
        %s648 = scalar_lea.vmem %s7, %s647
      $region60: #{_lambda_.1} parent=55 // pred_fallthru
        _
    $region56: #{_lambda_.1} parent=5 // pred_fallthru
      _
  $region6: #{_lambda_.1} parent=0 // loop_footer
    %s19 = sadd.s32 1, %s15
  $region7: #{_lambda_.1} parent=0 // loop_footer_branch
    %14 = sbr.rel target = $region3
  $region8: #{_lambda_.1} parent=0 // loop_exit
    _

</llo_original>
